<compile_context>
chip_gen: v7x
topology: tpu7x:2x2x1
jax: 0.10.0
libtpu: 0.0.40
codegen_flags: <defaults>
</compile_context>

<pallas_src>
import functools
import numpy as np
import jax
import jax.numpy as jnp
from jax import lax
from jax.experimental import pallas as pl
from jax.experimental.pallas import tpu as pltpu


def _rup(n, m):
    return ((n + m - 1) // m) * m


_ROW_TILE = 128          # row tile for linear / MLP / scale kernels
_EGNN_TILE_I = 128       # EGNN node (i) tile
_EGNN_TILE_J = 128       # EGNN neighbor (j) tile
_SEG_TS = 8              # segment-pool: segments per block
_SEG_TV = 128            # segment-pool: vertices per block
_EGNN_VMEM_LIMIT = 48 * 1024 * 1024   # fits v7x (64 MiB) with headroom


# ----------------------------------------------------------------------------
# Fused 2-layer MLP kernel  (bf16 MXU operands, f32 accumulation)
# ----------------------------------------------------------------------------
def _mlp_kernel(x_ref, w1_ref, b1_ref, w2_ref, b2_ref, o_ref, *, final_act):
    x = x_ref[...].astype(jnp.bfloat16)
    h = jnp.dot(x, w1_ref[...], preferred_element_type=jnp.float32) + b1_ref[...]
    h = jnp.maximum(h, 0.0)
    y = jnp.dot(h.astype(jnp.bfloat16), w2_ref[...],
                preferred_element_type=jnp.float32) + b2_ref[...]
    if final_act == "relu":
        y = jnp.maximum(y, 0.0)
    elif final_act == "sigmoid":
        y = jax.nn.sigmoid(y)
    o_ref[...] = y


def mlp_apply(p, x, final_act="none"):
    """Fused act(relu(x@W1+b1)@W2+b2); weights are pre-padded / pre-cast."""
    N, K = x.shape
    kp, hp_ = p["w1"].shape
    mp = p["w2"].shape[1]
    Nr = _rup(max(N, 1), _ROW_TILE)
    xp = jnp.pad(x, ((0, Nr - N), (0, kp - K)))
    out = pl.pallas_call(
        functools.partial(_mlp_kernel, final_act=final_act),
        out_shape=jax.ShapeDtypeStruct((Nr, mp), jnp.float32),
        grid=(Nr // _ROW_TILE,),
        in_specs=[
            pl.BlockSpec((_ROW_TILE, kp), lambda i: (i, 0)),
            pl.BlockSpec((kp, hp_), lambda i: (0, 0)),
            pl.BlockSpec((1, hp_), lambda i: (0, 0)),
            pl.BlockSpec((hp_, mp), lambda i: (0, 0)),
            pl.BlockSpec((1, mp), lambda i: (0, 0)),
        ],
        out_specs=pl.BlockSpec((_ROW_TILE, mp), lambda i: (i, 0)),
        compiler_params=pltpu.CompilerParams(dimension_semantics=("parallel",)),
    )(xp, p["w1"], p["b1"], p["w2"], p["b2"])
    return out[:N, :p["c_out"]]


# ----------------------------------------------------------------------------
# Single linear kernel
# ----------------------------------------------------------------------------
def _linear_kernel(x_ref, w_ref, b_ref, o_ref, *, activation):
    y = jnp.dot(x_ref[...].astype(jnp.bfloat16), w_ref[...],
                preferred_element_type=jnp.float32) + b_ref[...]
    if activation == "relu":
        y = jnp.maximum(y, 0.0)
    elif activation == "sigmoid":
        y = jax.nn.sigmoid(y)
    o_ref[...] = y


def linear_apply(p, x, activation="none"):
    N, K = x.shape
    kp, mp = p["w"].shape
    Nr = _rup(max(N, 1), _ROW_TILE)
    xp = jnp.pad(x, ((0, Nr - N), (0, kp - K)))
    out = pl.pallas_call(
        functools.partial(_linear_kernel, activation=activation),
        out_shape=jax.ShapeDtypeStruct((Nr, mp), jnp.float32),
        grid=(Nr // _ROW_TILE,),
        in_specs=[
            pl.BlockSpec((_ROW_TILE, kp), lambda i: (i, 0)),
            pl.BlockSpec((kp, mp), lambda i: (0, 0)),
            pl.BlockSpec((1, mp), lambda i: (0, 0)),
        ],
        out_specs=pl.BlockSpec((_ROW_TILE, mp), lambda i: (i, 0)),
        compiler_params=pltpu.CompilerParams(dimension_semantics=("parallel",)),
    )(xp, p["w"], p["b"])
    return out[:N, :p["c_out"]]


# ----------------------------------------------------------------------------
# Segment pooling (mean + max), tiled over the vertex axis
# ----------------------------------------------------------------------------
def _segment_pool_kernel(feat_ref, oh_ref, invc_ref, mean_ref, max_ref,
                         sum_acc, max_acc):
    j = pl.program_id(1)

    @pl.when(j == 0)
    def _():
        sum_acc[...] = jnp.zeros_like(sum_acc)
        max_acc[...] = jnp.full_like(max_acc, -1e30)

    oh = oh_ref[...]                                       # [TS, TV]
    feat = feat_ref[...]                                   # [TV, Fp]
    sum_acc[...] += jnp.dot(oh, feat, preferred_element_type=jnp.float32)
    masked = jnp.where(oh[:, :, None] > 0.0, feat[None, :, :], -1e30)
    max_acc[...] = jnp.maximum(max_acc[...], jnp.max(masked, axis=1))

    @pl.when(j == pl.num_programs(1) - 1)
    def _():
        mean_ref[...] = sum_acc[...] * invc_ref[...]
        max_ref[...] = max_acc[...]


def pallas_segment_pool(feat, onehot):
    """global_mean_pool and global_max_pool (segments given as a one-hot matrix)."""
    Nv, F = feat.shape
    Ns = onehot.shape[0]
    Fp = _rup(F, 128)
    Nvp = _rup(Nv, _SEG_TV)
    Nsp = _rup(Ns, _SEG_TS)
    fp = jnp.pad(feat, ((0, Nvp - Nv), (0, Fp - F)))
    ohp = jnp.pad(onehot, ((0, Nsp - Ns), (0, Nvp - Nv)))
    invc = 1.0 / jnp.maximum(jnp.sum(ohp, axis=1, keepdims=True), 1.0)   # [Nsp, 1]
    mean_p, max_p = pl.pallas_call(
        _segment_pool_kernel,
        out_shape=(jax.ShapeDtypeStruct((Nsp, Fp), jnp.float32),
                   jax.ShapeDtypeStruct((Nsp, Fp), jnp.float32)),
        grid=(Nsp // _SEG_TS, Nvp // _SEG_TV),
        in_specs=[
            pl.BlockSpec((_SEG_TV, Fp), lambda i, j: (j, 0)),
            pl.BlockSpec((_SEG_TS, _SEG_TV), lambda i, j: (i, j)),
            pl.BlockSpec((_SEG_TS, 1), lambda i, j: (i, 0)),
        ],
        out_specs=(pl.BlockSpec((_SEG_TS, Fp), lambda i, j: (i, 0)),
                   pl.BlockSpec((_SEG_TS, Fp), lambda i, j: (i, 0))),
        scratch_shapes=[pltpu.VMEM((_SEG_TS, Fp), jnp.float32),
                        pltpu.VMEM((_SEG_TS, Fp), jnp.float32)],
        compiler_params=pltpu.CompilerParams(
            dimension_semantics=("parallel", "arbitrary")),
    )(fp, ohp, invc)
    return mean_p[:Ns, :F], max_p[:Ns, :F]


# ----------------------------------------------------------------------------
# EGNN layer, tiled over the neighbor axis with streaming accumulators
# ----------------------------------------------------------------------------
_EGNN_KEYS = ("A", "B", "c", "b1", "We2", "be2", "Wx1", "bx1", "Wx2",
              "Wh1a", "Wh1b", "bh1", "Wh2", "bh2")


def _egnn_kernel(hi_ref, hj_ref, xi_ref, xj_ref, gi_ref, gj_ref,
                 A_ref, B_ref, c_ref, b1_ref, We2_ref, be2_ref,
                 Wx1_ref, bx1_ref, Wx2_ref,
                 Wh1a_ref, Wh1b_ref, bh1_ref, Wh2_ref, bh2_ref,
                 h_out_ref, x_out_ref,
                 aggm_acc, cx_acc, crow_acc, deg_acc, *, cutoff2):
    """One EGNN layer block: i-tile of nodes against a streamed j-tile of neighbors."""
    i_blk = pl.program_id(0)
    j_blk = pl.program_id(1)
    TI = hi_ref.shape[0]
    TJ = hj_ref.shape[0]

    @pl.when(j_blk == 0)
    def _():
        aggm_acc[...] = jnp.zeros_like(aggm_acc)
        cx_acc[...] = jnp.zeros_like(cx_acc)
        crow_acc[...] = jnp.zeros_like(crow_acc)
        deg_acc[...] = jnp.zeros_like(deg_acc)

    hi = hi_ref[...]                                       # [TI, F]
    hj = hj_ref[...]                                       # [TJ, F]
    xi = xi_ref[...]                                       # [TI, C*3]
    xj = xj_ref[...]                                       # [TJ, C*3]

    # pairwise squared distances of coordinate channel 0 (f32, matmul form)
    xi0 = xi[:, 0:3]
    xj0 = xj[:, 0:3]
    sqi = jnp.sum(xi0 * xi0, axis=1, keepdims=True)                    # [TI, 1]
    sqj = jnp.sum(xj0 * xj0, axis=1, keepdims=True)                    # [TJ, 1]
    ones_i = jnp.ones_like(sqi)
    gram = lax.dot_general(xi0, xj0, (((1,), (1,)), ((), ())),
                           preferred_element_type=jnp.float32)         # [TI, TJ]
    sqj_b = lax.dot_general(ones_i, sqj, (((1,), (1,)), ((), ())),
                            preferred_element_type=jnp.float32)        # [TI, TJ]
    gj_b = lax.dot_general(ones_i, gj_ref[...], (((1,), (1,)), ((), ())),
                           preferred_element_type=jnp.float32)         # [TI, TJ]
    d2 = sqi + sqj_b - 2.0 * gram

    # radius-graph adjacency (same graph, within cutoff, no self-loop) in-kernel
    row_ids = lax.broadcasted_iota(jnp.int32, (TI, TJ), 0) + i_blk * TI
    col_ids = lax.broadcasted_iota(jnp.int32, (TI, TJ), 1) + j_blk * TJ
    adj = ((d2 < cutoff2) & (gi_ref[...] == gj_b) & (row_ids != col_ids)
           ).astype(jnp.float32)                                        # [TI, TJ]

    # edge model phi_e([h_i, h_j, d2, edge_attr=1]) decomposed into matmuls
    hi_b = hi.astype(jnp.bfloat16)
    hj_b = hj.astype(jnp.bfloat16)
    hi_p = jnp.dot(hi_b, A_ref[...], preferred_element_type=jnp.float32) + b1_ref[...]
    hj_p = jnp.dot(hj_b, B_ref[...], preferred_element_type=jnp.float32)
    H = hi_p.shape[1]
    pre1 = (hi_p[:, None, :] + hj_p[None, :, :]
            + d2[:, :, None] * c_ref[...][None, :, :])                  # [TI, TJ, H]
    m1 = jax.nn.silu(pre1).reshape(TI * TJ, H)
    m2 = jax.nn.silu(jnp.dot(m1.astype(jnp.bfloat16), We2_ref[...],
                             preferred_element_type=jnp.float32) + be2_ref[...])

    # node-message aggregation (masked sum over this j tile)
    aggm_acc[...] += jnp.sum(m2.reshape(TI, TJ, H) * adj[:, :, None], axis=1)
    deg_acc[...] += jnp.sum(adj, axis=1, keepdims=True)

    # coordinate path: coeff_ij, accumulate coeff@x_j and row-sums
    tx = jax.nn.silu(jnp.dot(m2.astype(jnp.bfloat16), Wx1_ref[...],
                             preferred_element_type=jnp.float32) + bx1_ref[...])
    coeff = jnp.sum(tx.reshape(TI, TJ, H) * Wx2_ref[...][None, :, :], axis=-1) * adj
    cx_acc[...] += jnp.dot(coeff, xj, preferred_element_type=jnp.float32)
    crow_acc[...] += jnp.sum(coeff, axis=1, keepdims=True)

    @pl.when(j_blk == pl.num_programs(1) - 1)
    def _():
        # coordinate update: sum_j coeff_ij (x_i - x_j) / deg_i
        deg = jnp.maximum(deg_acc[...], 1.0)
        x_out_ref[...] = xi + (crow_acc[...] * xi - cx_acc[...]) / deg
        # node update phi_h([h, sum_j m_ij])
        th = jax.nn.silu(
            jnp.dot(hi_b, Wh1a_ref[...], preferred_element_type=jnp.float32)
            + jnp.dot(aggm_acc[...].astype(jnp.bfloat16), Wh1b_ref[...],
                      preferred_element_type=jnp.float32)
            + bh1_ref[...])
        h_out_ref[...] = (hi
                          + jnp.dot(th.astype(jnp.bfloat16), Wh2_ref[...],
                                    preferred_element_type=jnp.float32)
                          + bh2_ref[...])


def _egnn_layer_call(p, hp, xp, gp, cutoff):
    Np, F = hp.shape
    C3 = xp.shape[1]
    H = p["A"].shape[1]
    TI, TJ = _EGNN_TILE_I, _EGNN_TILE_J
    kern = functools.partial(_egnn_kernel, cutoff2=float(cutoff) * float(cutoff))
    weight_specs = [pl.BlockSpec(p[k].shape, lambda i, j: (0, 0)) for k in _EGNN_KEYS]
    h_out, x_out = pl.pallas_call(
        kern,
        out_shape=(jax.ShapeDtypeStruct((Np, F), jnp.float32),
                   jax.ShapeDtypeStruct((Np, C3), jnp.float32)),
        grid=(Np // TI, Np // TJ),
        in_specs=[
            pl.BlockSpec((TI, F), lambda i, j: (i, 0)),    # h_i
            pl.BlockSpec((TJ, F), lambda i, j: (j, 0)),    # h_j
            pl.BlockSpec((TI, C3), lambda i, j: (i, 0)),   # x_i
            pl.BlockSpec((TJ, C3), lambda i, j: (j, 0)),   # x_j
            pl.BlockSpec((TI, 1), lambda i, j: (i, 0)),    # graph id (i rows)
            pl.BlockSpec((TJ, 1), lambda i, j: (j, 0)),    # graph id (j rows)
        ] + weight_specs,
        out_specs=(pl.BlockSpec((TI, F), lambda i, j: (i, 0)),
                   pl.BlockSpec((TI, C3), lambda i, j: (i, 0))),
        scratch_shapes=[pltpu.VMEM((TI, F), jnp.float32),   # aggm (H == F)
                        pltpu.VMEM((TI, C3), jnp.float32),  # coeff @ x_j
                        pltpu.VMEM((TI, 1), jnp.float32),   # coeff row-sum
                        pltpu.VMEM((TI, 1), jnp.float32)],  # degree
        compiler_params=pltpu.CompilerParams(
            dimension_semantics=("parallel", "arbitrary"),
            vmem_limit_bytes=_EGNN_VMEM_LIMIT),
    )(hp, hp, xp, xp, gp, gp, *[p[k] for k in _EGNN_KEYS])
    return h_out, x_out


def run_egnn_stack(layers, h, x_flat, gid, cutoff, collect=False):
    """Pad once, run all layers on padded buffers, slice at the end."""
    N, _ = h.shape
    Np = _rup(max(N, 1), max(_EGNN_TILE_I, _EGNN_TILE_J))
    hp = jnp.pad(h, ((0, Np - N), (0, 0)))
    xp = jnp.pad(x_flat, ((0, Np - N), (0, 0)))
    gp = jnp.pad(gid.astype(jnp.float32).reshape(-1, 1),
                 ((0, Np - N), (0, 0)), constant_values=-1.0)
    hs = []
    for lp in layers:
        hp, xp = _egnn_layer_call(lp, hp, xp, gp, cutoff)
        if collect:
            hs.append(hp[:N])
    if collect:
        return hs, xp[:N]
    return hp[:N], xp[:N]


# ----------------------------------------------------------------------------
# Dense-attention gating (broadcast per 128-wide feature chunk inside kernel)
# ----------------------------------------------------------------------------
def _scale_kernel(x_ref, a_ref, o_ref, *, chunk, n_chunks):
    a = a_ref[...]                                         # [TR, n_chunks]
    for c in range(n_chunks):
        sl = slice(c * chunk, (c + 1) * chunk)
        o_ref[:, sl] = x_ref[:, sl] * a[:, c:c + 1]


def pallas_scale(x, att, out_features):
    N, C = x.shape
    natt = att.shape[1]
    assert C == natt * out_features and out_features % 128 == 0
    Nr = _rup(max(N, 1), _ROW_TILE)
    xp = jnp.pad(x, ((0, Nr - N), (0, 0)))
    ap = jnp.pad(att, ((0, Nr - N), (0, 0)))
    out = pl.pallas_call(
        functools.partial(_scale_kernel, chunk=out_features, n_chunks=natt),
        out_shape=jax.ShapeDtypeStruct((Nr, C), jnp.float32),
        grid=(Nr // _ROW_TILE,),
        in_specs=[pl.BlockSpec((_ROW_TILE, C), lambda i: (i, 0)),
                  pl.BlockSpec((_ROW_TILE, natt), lambda i: (i, 0))],
        out_specs=pl.BlockSpec((_ROW_TILE, C), lambda i: (i, 0)),
        compiler_params=pltpu.CompilerParams(dimension_semantics=("parallel",)),
    )(xp, ap)
    return out[:N]


# ----------------------------------------------------------------------------
# Parameters (deterministic synthetic init; padded + bf16-cast once)
# ----------------------------------------------------------------------------
class KeyGen:
    def __init__(self, key):
        self.key = key

    def __call__(self):
        self.key, sub = jax.random.split(self.key)
        return sub


def _dense(kg, fan_in, fan_out, scale=1.0):
    w = (scale / np.sqrt(fan_in)) * jax.random.normal(kg(), (fan_in, fan_out), jnp.float32)
    b = jnp.zeros((fan_out,), jnp.float32)
    return w, b


def _pad_w(w, kp, mp):
    return jnp.zeros((kp, mp), jnp.bfloat16).at[:w.shape[0], :w.shape[1]].set(
        w.astype(jnp.bfloat16))


def _pad_b(b, mp):
    return jnp.zeros((1, mp), jnp.float32).at[0, :b.shape[0]].set(b)


def make_mlp(kg, c_in, c_hid, c_out):
    # TODO(synk): torch_geometric MLP BatchNorm/Dropout are identity at init/eval and omitted.
    w1, b1 = _dense(kg, c_in, c_hid)
    w2, b2 = _dense(kg, c_hid, c_out)
    kp, hp_, mp = _rup(c_in, 128), _rup(c_hid, 128), _rup(c_out, 128)
    return {"w1": _pad_w(w1, kp, hp_), "b1": _pad_b(b1, hp_),
            "w2": _pad_w(w2, hp_, mp), "b2": _pad_b(b2, mp),
            "c_in": c_in, "c_out": c_out}


def make_linear(kg, c_in, c_out):
    w, b = _dense(kg, c_in, c_out)
    kp, mp = _rup(c_in, 128), _rup(c_out, 128)
    return {"w": _pad_w(w, kp, mp), "b": _pad_b(b, mp), "c_in": c_in, "c_out": c_out}


def make_egnn_layer(kg, F, H):
    def bf(w):
        return w.astype(jnp.bfloat16)
    p = {}
    A, _ = _dense(kg, F, H); p["A"] = bf(A)
    B, _ = _dense(kg, F, H); p["B"] = bf(B)
    p["c"] = 0.1 * jax.random.normal(kg(), (1, H), jnp.float32)
    p["b1"] = jnp.zeros((1, H), jnp.float32)
    We2, be2 = _dense(kg, H, H); p["We2"] = bf(We2); p["be2"] = be2.reshape(1, H)
    Wx1, bx1 = _dense(kg, H, H); p["Wx1"] = bf(Wx1); p["bx1"] = bx1.reshape(1, H)
    p["Wx2"] = (0.01 / np.sqrt(H)) * jax.random.normal(kg(), (1, H), jnp.float32)
    Wh1a, _ = _dense(kg, F, H); p["Wh1a"] = bf(Wh1a)
    Wh1b, bh1 = _dense(kg, H, H); p["Wh1b"] = bf(Wh1b); p["bh1"] = bh1.reshape(1, H)
    Wh2, bh2 = _dense(kg, H, F); p["Wh2"] = bf(Wh2); p["bh2"] = bh2.reshape(1, F)
    return p


def init_equipocket_params(key, out_features=128, surface_egnn_depth=4,
                           num_atom_types=20, atom_channels=16):
    kg = KeyGen(key)
    p = {}
    p["trans_local"] = make_mlp(kg, 7, out_features // 2, out_features // 2)
    p["trans_surface"] = make_mlp(kg, 14, out_features, out_features)
    # Global structure model (Baseline_Models 'gat_egnn'):
    # TODO(synk): Baseline_Models source unavailable; GAT(depth=1) stage approximated by
    #             atom-embedding -> linear -> 3 dense EGNN layers (egnn_depth=3).
    p["atom_embedding"] = jax.random.normal(kg(), (num_atom_types, atom_channels), jnp.float32)
    p["gsm_in"] = make_linear(kg, atom_channels, out_features)
    p["gsm_layers"] = [make_egnn_layer(kg, out_features, out_features) for _ in range(3)]
    p["trans_geo"] = make_mlp(kg, 3 * out_features, out_features, out_features)
    p["se_in"] = make_linear(kg, out_features, out_features)
    p["se_layers"] = [make_egnn_layer(kg, out_features, out_features)
                      for _ in range(surface_egnn_depth)]
    p["cal_attention"] = make_mlp(kg, surface_egnn_depth + 2, out_features,
                                  surface_egnn_depth + 1)
    last = out_features * (surface_egnn_depth + 1)
    p["all_out"] = make_mlp(kg, last, last, 1)
    return p


# ----------------------------------------------------------------------------
# Forward pass (glue in JAX, compute in Pallas)
# ----------------------------------------------------------------------------
def equipocket_forward(params, data, *, out_features=128, cutoff=6.0):
    surf_idx = data["surf_idx"]
    pos = data["pos"]
    batch = data["batch"]
    surface_pos = pos[surf_idx]
    new_batch = batch[surf_idx]

    # ---- local geometric modeling ----
    sd = data["surface_descriptor"]                        # [Nv, 7]
    vert_onehot = data["vert_onehot"]                      # [Ns, Nv]
    local_geo = mlp_apply(params["trans_local"], sd)       # [Nv, out/2]
    mean_g, max_g = pallas_segment_pool(local_geo, vert_onehot)
    geometric_embedding = jnp.concatenate([mean_g, max_g], axis=-1)     # [Ns, out]
    mean_s, max_s = pallas_segment_pool(sd, vert_onehot)
    surface_size = jnp.concatenate([mean_s, max_s], axis=1)             # [Ns, 14]
    surface_size_embedding = mlp_apply(params["trans_surface"], surface_size)

    # ---- global structure modeling (simplified gat_egnn baseline) ----
    atom_emb = params["atom_embedding"][data["atom_type"]]              # [Na, 16]
    h = linear_apply(params["gsm_in"], atom_emb, activation="relu")
    h, _ = run_egnn_stack(params["gsm_layers"], h, pos, batch, cutoff)
    global_structure_node_embedding = h[surf_idx]                       # [Ns, out]

    node_embedding = jnp.concatenate(
        [geometric_embedding, surface_size_embedding, global_structure_node_embedding], axis=1)
    node_embedding = mlp_apply(params["trans_geo"], node_embedding)     # [Ns, out]

    # ---- surface EGNN (per-graph radius_graph == in-kernel graph-id + cutoff mask) ----
    x_flat = jnp.concatenate([surface_pos, data["surface_center_pos"]], axis=1)  # [Ns, 6]
    h = linear_apply(params["se_in"], node_embedding, activation="none")
    hs, x_final = run_egnn_stack(params["se_layers"], h, x_flat, new_batch, cutoff,
                                 collect=True)
    node_embedding = jnp.concatenate([h] + hs, axis=1)     # [Ns, out*(depth+1)]
    node_pos = x_final[:, 0:3]

    # ---- dense attention ----
    cr = data["cutoff_ratio"][surf_idx]                    # [Ns, depth+2]
    att = mlp_apply(params["cal_attention"], cr, final_act="sigmoid")   # [Ns, depth+1]
    node_embedding = pallas_scale(node_embedding, att, out_features)

    y_hat = mlp_apply(params["all_out"], node_embedding)   # [Ns, 1]
    angle = node_pos - surface_pos                         # [Ns, 3]
    return y_hat, angle


# ----------------------------------------------------------------------------
if __name__ == "__main__":
    OUT_F = 128
    DEPTH = 4        # surface_egnn_depth
    CUTOFF = 6.0
    NATOM = 16       # 2 graphs x 8 atoms

    key = jax.random.PRNGKey(0)
    key, k_pos, k_scp, k_sd, k_cr, k_at = jax.random.split(key, 6)

    batch = jnp.array([0] * 8 + [1] * 8, dtype=jnp.int32)
    atom_in_surface = np.array([1, 1, 1, 0, 1, 1, 1, 0] * 2, dtype=np.int32)
    surf_idx = jnp.array(np.nonzero(atom_in_surface)[0], dtype=jnp.int32)
    NS = int(surf_idx.shape[0])                            # 12 surface atoms

    pos = 2.0 * jax.random.normal(k_pos, (NATOM, 3), jnp.float32)
    surface_center_pos = pos[surf_idx] + 0.5 * jax.random.normal(k_scp, (NS, 3), jnp.float32)

    VERTS_PER = 4
    NV = NS * VERTS_PER
    vert_batch = np.repeat(np.arange(NS), VERTS_PER)       # vertex -> surface-atom segment
    vert_onehot = jnp.asarray(
        (vert_batch[:, None] == np.arange(NS)[None, :]).T.astype(np.float32))   # [NS, NV]
    surface_descriptor = jax.random.normal(k_sd, (NV, 7), jnp.float32)
    cutoff_ratio = jax.random.uniform(k_cr, (NATOM, DEPTH + 2), dtype=jnp.float32)
    atom_type = jax.random.randint(k_at, (NATOM,), 0, 20)

    data = dict(pos=pos, batch=batch, surf_idx=surf_idx,
                surface_center_pos=surface_center_pos,
                vert_onehot=vert_onehot,
                surface_descriptor=surface_descriptor,
                cutoff_ratio=cutoff_ratio, atom_type=atom_type)

    params = init_equipocket_params(jax.random.PRNGKey(42),
                                    out_features=OUT_F, surface_egnn_depth=DEPTH)

    y_hat, angle = equipocket_forward(params, data, out_features=OUT_F, cutoff=CUTOFF)
    y_hat = jax.block_until_ready(y_hat)
    angle = jax.block_until_ready(angle)

    assert y_hat.shape == (NS, 1), y_hat.shape
    assert angle.shape == (NS, 3), angle.shape
    assert bool(jnp.all(jnp.isfinite(y_hat))) and bool(jnp.all(jnp.isfinite(angle)))
    print("KERNEL_OK")
</pallas_src>

<mosaic_0001>
module attributes {stable_mosaic.version = 11 : i64} {
  func.func @_mlp_kernel(%arg0: i32, %arg1: memref<128x128xf32, #tpu.memory_space<vmem>>, %arg2: memref<128x128xbf16, #tpu.memory_space<vmem>>, %arg3: memref<1x128xf32, #tpu.memory_space<vmem>>, %arg4: memref<128x128xbf16, #tpu.memory_space<vmem>>, %arg5: memref<1x128xf32, #tpu.memory_space<vmem>>, %arg6: memref<128x128xf32, #tpu.memory_space<vmem>>) attributes {dimension_semantics = [#tpu.dimension_semantics<parallel>], iteration_bounds = array<i64: 1>, scalar_prefetch = 0 : i64, scratch_operands = 0 : i64, tpu.core_type = #tpu.core_type<tc>, window_params = [{transform_indices = @transform_0, window_bounds = array<i64: 128, 128>}, {pipeline_mode = #tpu.pipeline_mode<synchronous>, transform_indices = @transform_1, window_bounds = array<i64: 128, 128>}, {pipeline_mode = #tpu.pipeline_mode<synchronous>, transform_indices = @transform_2, window_bounds = array<i64: 1, 128>}, {pipeline_mode = #tpu.pipeline_mode<synchronous>, transform_indices = @transform_3, window_bounds = array<i64: 128, 128>}, {pipeline_mode = #tpu.pipeline_mode<synchronous>, transform_indices = @transform_4, window_bounds = array<i64: 1, 128>}, {transform_indices = @transform_5, window_bounds = array<i64: 128, 128>}]} {
    %c0 = arith.constant 0 : index
    %c0_0 = arith.constant 0 : index
    %0 = vector.load %arg1[%c0, %c0_0] : memref<128x128xf32, #tpu.memory_space<vmem>>, vector<128x128xf32>
    %1 = arith.truncf %0 : vector<128x128xf32> to vector<128x128xbf16>
    %c0_1 = arith.constant 0 : index
    %c0_2 = arith.constant 0 : index
    %2 = vector.load %arg2[%c0_1, %c0_2] : memref<128x128xbf16, #tpu.memory_space<vmem>>, vector<128x128xbf16>
    %cst = arith.constant dense<0.000000e+00> : vector<128x128xf32>
    %3 = tpu.matmul %1, %2, %cst {dimension_numbers = #tpu.dot_dimension_numbers<[1], [0], [0], [1], [0, 0, 1, 1], [], []>} : vector<128x128xbf16>, vector<128x128xbf16>, vector<128x128xf32> -> vector<128x128xf32>
    %c0_3 = arith.constant 0 : index
    %c0_4 = arith.constant 0 : index
    %4 = vector.load %arg3[%c0_3, %c0_4] : memref<1x128xf32, #tpu.memory_space<vmem>>, vector<1x128xf32>
    %5 = vector.broadcast %4 : vector<1x128xf32> to vector<128x128xf32>
    %6 = arith.addf %3, %5 : vector<128x128xf32>
    %cst_5 = arith.constant 0.000000e+00 : f32
    %7 = vector.broadcast %cst_5 : f32 to vector<128x128xf32>
    %8 = arith.maximumf %6, %7 : vector<128x128xf32>
    %9 = arith.truncf %8 : vector<128x128xf32> to vector<128x128xbf16>
    %c0_6 = arith.constant 0 : index
    %c0_7 = arith.constant 0 : index
    %10 = vector.load %arg4[%c0_6, %c0_7] : memref<128x128xbf16, #tpu.memory_space<vmem>>, vector<128x128xbf16>
    %cst_8 = arith.constant dense<0.000000e+00> : vector<128x128xf32>
    %11 = tpu.matmul %9, %10, %cst_8 {dimension_numbers = #tpu.dot_dimension_numbers<[1], [0], [0], [1], [0, 0, 1, 1], [], []>} : vector<128x128xbf16>, vector<128x128xbf16>, vector<128x128xf32> -> vector<128x128xf32>
    %c0_9 = arith.constant 0 : index
    %c0_10 = arith.constant 0 : index
    %12 = vector.load %arg5[%c0_9, %c0_10] : memref<1x128xf32, #tpu.memory_space<vmem>>, vector<1x128xf32>
    %13 = vector.broadcast %12 : vector<1x128xf32> to vector<128x128xf32>
    %14 = arith.addf %11, %13 : vector<128x128xf32>
    %c0_11 = arith.constant 0 : index
    %c0_12 = arith.constant 0 : index
    %15 = vector.load %arg6[%c0_11, %c0_12] : memref<128x128xf32, #tpu.memory_space<vmem>>, vector<128x128xf32>
    tpu.vector_store %arg6[%c0_11, %c0_12], %14 {strides = array<i32>} : memref<128x128xf32, #tpu.memory_space<vmem>>, vector<128x128xf32>,
    return
  }
  func.func @transform_0(%arg0: i32) -> (i32, i32) {
    %c0_i32 = arith.constant 0 : i32
    %c0_i32_0 = arith.constant 0 : i32
    return %arg0, %c0_i32 : i32, i32
  }
  func.func @transform_1(%arg0: i32) -> (i32, i32) {
    %c0_i32 = arith.constant 0 : i32
    %c0_i32_0 = arith.constant 0 : i32
    %c0_i32_1 = arith.constant 0 : i32
    return %c0_i32, %c0_i32_0 : i32, i32
  }
  func.func @transform_2(%arg0: i32) -> (i32, i32) {
    %c0_i32 = arith.constant 0 : i32
    %c0_i32_0 = arith.constant 0 : i32
    %c0_i32_1 = arith.constant 0 : i32
    return %c0_i32, %c0_i32_0 : i32, i32
  }
  func.func @transform_3(%arg0: i32) -> (i32, i32) {
    %c0_i32 = arith.constant 0 : i32
    %c0_i32_0 = arith.constant 0 : i32
    %c0_i32_1 = arith.constant 0 : i32
    return %c0_i32, %c0_i32_0 : i32, i32
  }
  func.func @transform_4(%arg0: i32) -> (i32, i32) {
    %c0_i32 = arith.constant 0 : i32
    %c0_i32_0 = arith.constant 0 : i32
    %c0_i32_1 = arith.constant 0 : i32
    return %c0_i32, %c0_i32_0 : i32, i32
  }
  func.func @transform_5(%arg0: i32) -> (i32, i32) {
    %c0_i32 = arith.constant 0 : i32
    %c0_i32_0 = arith.constant 0 : i32
    return %arg0, %c0_i32 : i32, i32
  }
}

</mosaic_0001>

<llo_original>
// kernel: tpu_custom_call.1
$region0: #{tpu_custom_call.1}
  #allocation0 [shape = 'u32[]', space=smem, size = 0x4, offset = 0x4, fixed_abs, tag = 'smem constant byte address 0x4 - core index']
  #allocation1 [shape = 'u32[144,128]{1,0:T(1,128)}', space=vmem, size = 0x12000, scoped, tag = 'internal scratch']
  %s0 = inlined_call_operand.hbm [shape: f32[128,128], index: 0, kind: input, shape index: {}]
  %s1 = inlined_call_operand.hbm [shape: bf16[128,128], index: 1, kind: input, shape index: {}]
  %s2 = inlined_call_operand.vmem [shape: f32[1,128], index: 2, kind: input, shape index: {}]
  %s3 = inlined_call_operand.hbm [shape: bf16[128,128], index: 3, kind: input, shape index: {}]
  %s4 = inlined_call_operand.vmem [shape: f32[1,128], index: 4, kind: input, shape index: {}]
  %s5 = inlined_call_operand.hbm [shape: f32[128,128], index: 5, kind: output, shape index: {}]
  %s6 = sld [smem:[#allocation0]]
  $region42: #{tpu_custom_call.1} parent=0
    _
  %s8 = ssub.s32 1, %s6
  %s9 = scalar_select 0, %s8, %s6
  $region1: #{tpu_custom_call.1} parent=0
    #allocation2 [shape = 'u8[65536]{0}', space=vmem, size = 0x10000, scoped, tag = 'input window, operand 0, single buffered']
    #allocation3 [shape = 's32[1]{0}', space=sflag, size = 0x4, scoped, tag = 'scoped memory for tpu_custom_call.1']
    #allocation4 [shape = 's32[1]{0}', space=sflag, size = 0x4, scoped, tag = 'scoped memory for tpu_custom_call.1']
    #allocation5 [shape = 'u8[32768]{0}', space=vmem, size = 0x8000, scoped, tag = 'input window, operand 1, single buffered']
    #allocation6 [shape = 's32[1]{0}', space=sflag, size = 0x4, scoped, tag = 'scoped memory for tpu_custom_call.1']
    #allocation7 [shape = 'u8[32768]{0}', space=vmem, size = 0x8000, scoped, tag = 'input window, operand 3, single buffered']
    #allocation8 [shape = 'u8[65536]{0}', space=vmem, size = 0x10000, scoped, tag = 'output window, operand 0, single buffered']
    %10 = vsyncpa [#allocation3], 0
    %11 = vsyncpa [#allocation6], 0
    %12 = vsyncpa [#allocation4], 0
    // Predicated region
    $region2: #{tpu_custom_call.1} parent=1 // pred_check
      _
    $region3: #{tpu_custom_call.1} parent=1 // pred_check_branch
      %14 = sbr.rel (0) target = $region5
    $region4: #{tpu_custom_call.1} parent=1 // pred_region
      %s16 = ssub.s32 2048, 2048
      %17 = vsyncadd [#allocation3], %s16
      %s18 = sshll.u32 [#allocation2], 4
      %s19 = int_to_ptr.vmem [resolvable:$true] %s18
      %24 = dma.hbm_to_vmem [thread:$0]  %s0, 2048, %s19, [#allocation3], 128, 128, 8
    $region5: #{tpu_custom_call.1} parent=1 // pred_fallthru
      _
    // Predicated region
    $region6: #{tpu_custom_call.1} parent=1 // pred_check
      _
    $region7: #{tpu_custom_call.1} parent=1 // pred_check_branch
      %26 = sbr.rel (0) target = $region9
    $region8: #{tpu_custom_call.1} parent=1 // pred_region
      %s28 = ssub.s32 1024, 1024
      %29 = vsyncadd [#allocation6], %s28
      %s30 = sshll.u32 [#allocation5], 4
      %s31 = int_to_ptr.vmem [resolvable:$true] %s30
      %36 = dma.hbm_to_vmem [thread:$0]  %s1, 1024, %s31, [#allocation6], 64, 64, 4
    $region9: #{tpu_custom_call.1} parent=1 // pred_fallthru
      _
    // Predicated region
    $region10: #{tpu_custom_call.1} parent=1 // pred_check
      _
    $region11: #{tpu_custom_call.1} parent=1 // pred_check_branch
      %38 = sbr.rel (0) target = $region13
    $region12: #{tpu_custom_call.1} parent=1 // pred_region
      _
    $region13: #{tpu_custom_call.1} parent=1 // pred_fallthru
      _
    // Predicated region
    $region14: #{tpu_custom_call.1} parent=1 // pred_check
      _
    $region15: #{tpu_custom_call.1} parent=1 // pred_check_branch
      %40 = sbr.rel (0) target = $region17
    $region16: #{tpu_custom_call.1} parent=1 // pred_region
      %s42 = ssub.s32 1024, 1024
      %43 = vsyncadd [#allocation6], %s42
      %s44 = sshll.u32 [#allocation7], 4
      %s45 = int_to_ptr.vmem [resolvable:$true] %s44
      %50 = dma.hbm_to_vmem [thread:$0]  %s3, 1024, %s45, [#allocation6], 64, 64, 4
    $region17: #{tpu_custom_call.1} parent=1 // pred_fallthru
      _
    // Predicated region
    $region18: #{tpu_custom_call.1} parent=1 // pred_check
      _
    $region19: #{tpu_custom_call.1} parent=1 // pred_check_branch
      %52 = sbr.rel (0) target = $region21
    $region20: #{tpu_custom_call.1} parent=1 // pred_region
      _
    $region21: #{tpu_custom_call.1} parent=1 // pred_fallthru
      _
    // Predicated region
    $region22: #{tpu_custom_call.1} parent=1 // pred_check
      _
    $region23: #{tpu_custom_call.1} parent=1 // pred_check_branch
      %54 = sbr.rel (0) target = $region25
    $region24: #{tpu_custom_call.1} parent=1 // pred_region
      %55 = dma.done [#allocation3], 2048
    $region25: #{tpu_custom_call.1} parent=1 // pred_fallthru
      _
    // Predicated region
    $region26: #{tpu_custom_call.1} parent=1 // pred_check
      _
    $region27: #{tpu_custom_call.1} parent=1 // pred_check_branch
      %57 = sbr.rel (0) target = $region29
    $region28: #{tpu_custom_call.1} parent=1 // pred_region
      %58 = dma.done [#allocation6], 1024
    $region29: #{tpu_custom_call.1} parent=1 // pred_fallthru
      _
    // Predicated region
    $region30: #{tpu_custom_call.1} parent=1 // pred_check
      _
    $region31: #{tpu_custom_call.1} parent=1 // pred_check_branch
      %60 = sbr.rel (0) target = $region33
    $region32: #{tpu_custom_call.1} parent=1 // pred_region
      %61 = dma.done [#allocation6], 1024
    $region33: #{tpu_custom_call.1} parent=1 // pred_fallthru
      _
    %v63 = vld [vmem:[#allocation2] sm:$0xff]
    %v64 = vld [vmem:[#allocation2 + $0x8] sm:$0xff]
    %v65 = vld [vmem:[#allocation2 + $0x10] sm:$0xff]
    %v66 = vld [vmem:[#allocation2 + $0x18] sm:$0xff]
    %v67 = vld [vmem:[#allocation2 + $0x20] sm:$0xff]
    %v68 = vld [vmem:[#allocation2 + $0x28] sm:$0xff]
    %v69 = vld [vmem:[#allocation2 + $0x30] sm:$0xff]
    %v70 = vld [vmem:[#allocation2 + $0x38] sm:$0xff]
    %v71 = vld [vmem:[#allocation2 + $0x40] sm:$0xff]
    %v72 = vld [vmem:[#allocation2 + $0x48] sm:$0xff]
    %v73 = vld [vmem:[#allocation2 + $0x50] sm:$0xff]
    %v74 = vld [vmem:[#allocation2 + $0x58] sm:$0xff]
    %v75 = vld [vmem:[#allocation2 + $0x60] sm:$0xff]
    %v76 = vld [vmem:[#allocation2 + $0x68] sm:$0xff]
    %v77 = vld [vmem:[#allocation2 + $0x70] sm:$0xff]
    %v78 = vld [vmem:[#allocation2 + $0x78] sm:$0xff]
    %v79 = vpack.c.bf16 %v64, %v63
    %v80 = vpack.c.bf16 %v66, %v65
    %v81 = vpack.c.bf16 %v68, %v67
    %v82 = vpack.c.bf16 %v70, %v69
    %v83 = vpack.c.bf16 %v72, %v71
    %v84 = vpack.c.bf16 %v74, %v73
    %v85 = vpack.c.bf16 %v76, %v75
    %v86 = vpack.c.bf16 %v78, %v77
    %v87 = vld [vmem:[#allocation5] sm:$0xf]
    %v88 = vld [vmem:[#allocation5 + $0x4] sm:$0xf]
    %v89 = vld [vmem:[#allocation5 + $0x8] sm:$0xf]
    %v90 = vld [vmem:[#allocation5 + $0xc] sm:$0xf]
    %v91 = vld [vmem:[#allocation5 + $0x10] sm:$0xf]
    %v92 = vld [vmem:[#allocation5 + $0x14] sm:$0xf]
    %v93 = vld [vmem:[#allocation5 + $0x18] sm:$0xf]
    %v94 = vld [vmem:[#allocation5 + $0x1c] sm:$0xf]
    %v95 = vld [vmem:[#allocation5 + $0x20] sm:$0xf]
    %v96 = vld [vmem:[#allocation5 + $0x24] sm:$0xf]
    %v97 = vld [vmem:[#allocation5 + $0x28] sm:$0xf]
    %v98 = vld [vmem:[#allocation5 + $0x2c] sm:$0xf]
    %v99 = vld [vmem:[#allocation5 + $0x30] sm:$0xf]
    %v100 = vld [vmem:[#allocation5 + $0x34] sm:$0xf]
    %v101 = vld [vmem:[#allocation5 + $0x38] sm:$0xf]
    %v102 = vld [vmem:[#allocation5 + $0x3c] sm:$0xf]
    %v103 = vld [vmem:[%s2] sm:$0x1]
    %v105 = vlaneseq
    %v106 = vshrl.u32 %v105, 7
    %v107 = vsub.s32 0, %v106
    %v108 = vrot.slane %v103, %v107
    %v126 = vunpack.c.l.b16 %v87
    %v127 = vunpack.c.l.b16 %v88
    %v128 = vunpack.c.l.b16 %v89
    %v129 = vunpack.c.l.b16 %v90
    %v130 = vunpack.c.l.b16 %v91
    %v131 = vunpack.c.l.b16 %v92
    %v132 = vunpack.c.l.b16 %v93
    %v133 = vunpack.c.l.b16 %v94
    %v134 = vunpack.c.l.b16 %v95
    %v135 = vunpack.c.l.b16 %v96
    %v136 = vunpack.c.l.b16 %v97
    %v137 = vunpack.c.l.b16 %v98
    %v138 = vunpack.c.l.b16 %v99
    %v139 = vunpack.c.l.b16 %v100
    %v140 = vunpack.c.l.b16 %v101
    %v141 = vunpack.c.l.b16 %v102
    %v142 = vpack.c.b16 %v127, %v126
    %v143 = vpack.c.b16 %v129, %v128
    %v144 = vpack.c.b16 %v131, %v130
    %v145 = vpack.c.b16 %v133, %v132
    %v146 = vpack.c.b16 %v135, %v134
    %v147 = vpack.c.b16 %v137, %v136
    %v148 = vpack.c.b16 %v139, %v138
    %v149 = vpack.c.b16 %v141, %v140
    %158 = vmatprep.subr.bf16.mxu0 0
    %159 = vmatpush1.bf16.msra.mxu0 %v142
    %160 = vmatprep.subr.bf16.mxu0 0
    %161 = vmatpush1.bf16.msra.mxu0 %v143
    %162 = vmatprep.subr.bf16.mxu0 0
    %163 = vmatpush1.bf16.msra.mxu0 %v144
    %164 = vmatprep.subr.bf16.mxu0 0
    %165 = vmatpush1.bf16.msra.mxu0 %v145
    %166 = vmatprep.subr.bf16.mxu0 0
    %167 = vmatpush1.bf16.msra.mxu0 %v146
    %168 = vmatprep.subr.bf16.mxu0 0
    %169 = vmatpush1.bf16.msra.mxu0 %v147
    %170 = vmatprep.subr.bf16.mxu0 0
    %171 = vmatpush1.bf16.msra.mxu0 %v148
    %172 = vmatprep.subr.bf16.mxu0 0
    %173 = vmatpush1.bf16.msra.mxu0 %v149
    %174 = vmatprep.subr.bf16.mxu0 0
    %175 = vmatpush1.bf16.msra.mxu0 0
    %176 = vmatprep.subr.bf16.mxu0 0
    %177 = vmatpush1.bf16.msra.mxu0 0
    %178 = vmatprep.subr.bf16.mxu0 0
    %179 = vmatpush1.bf16.msra.mxu0 0
    %180 = vmatprep.subr.bf16.mxu0 0
    %181 = vmatpush1.bf16.msra.mxu0 0
    %182 = vmatprep.subr.bf16.mxu0 0
    %183 = vmatpush1.bf16.msra.mxu0 0
    %184 = vmatprep.subr.bf16.mxu0 0
    %185 = vmatpush1.bf16.msra.mxu0 0
    %186 = vmatprep.subr.bf16.mxu0 0
    %187 = vmatpush1.bf16.msra.mxu0 0
    %188 = vmatprep.subr.bf16.mxu0 0
    %189 = vmatpush1.bf16.msra.mxu0 0
    %190 = vmatprep.mubr.bf16.mxu0 0
    %191 = vmatmul.mubr.bf16.gmra.mrb[0].mxu0 %v79
    %v192 = vpop.f32.mrb[0].mxu0
    %v193 = vadd.f32 %v108, %v192
    %v194 = vpop.f32.mrb[0].mxu0
    %v195 = vpop.f32.mrb[0].mxu0
    %v196 = vadd.f32 %v108, %v195
    %v197 = vpop.f32.mrb[0].mxu0
    %198 = vmatprep.mubr.bf16.mxu0 0
    %199 = vmatmul.mubr.bf16.gmra.mrb[0].mxu0 %v80
    %v200 = vpop.f32.mrb[0].mxu0
    %v201 = vadd.f32 %v108, %v200
    %v202 = vpop.f32.mrb[0].mxu0
    %v203 = vpop.f32.mrb[0].mxu0
    %v204 = vadd.f32 %v108, %v203
    %v205 = vpop.f32.mrb[0].mxu0
    %206 = vmatprep.mubr.bf16.mxu0 0
    %207 = vmatmul.mubr.bf16.gmra.mrb[0].mxu0 %v81
    %v208 = vpop.f32.mrb[0].mxu0
    %v209 = vadd.f32 %v108, %v208
    %v210 = vpop.f32.mrb[0].mxu0
    %v211 = vpop.f32.mrb[0].mxu0
    %v212 = vadd.f32 %v108, %v211
    %v213 = vpop.f32.mrb[0].mxu0
    %214 = vmatprep.mubr.bf16.mxu0 0
    %215 = vmatmul.mubr.bf16.gmra.mrb[0].mxu0 %v82
    %v216 = vpop.f32.mrb[0].mxu0
    %v217 = vadd.f32 %v108, %v216
    %v218 = vpop.f32.mrb[0].mxu0
    %v219 = vpop.f32.mrb[0].mxu0
    %v220 = vadd.f32 %v108, %v219
    %v221 = vpop.f32.mrb[0].mxu0
    %222 = vmatprep.mubr.bf16.mxu0 0
    %223 = vmatmul.mubr.bf16.gmra.mrb[0].mxu0 %v83
    %v224 = vpop.f32.mrb[0].mxu0
    %v225 = vadd.f32 %v108, %v224
    %v226 = vpop.f32.mrb[0].mxu0
    %v227 = vpop.f32.mrb[0].mxu0
    %v228 = vadd.f32 %v108, %v227
    %v229 = vpop.f32.mrb[0].mxu0
    %230 = vmatprep.mubr.bf16.mxu0 0
    %231 = vmatmul.mubr.bf16.gmra.mrb[0].mxu0 %v84
    %v232 = vpop.f32.mrb[0].mxu0
    %v233 = vadd.f32 %v108, %v232
    %v234 = vpop.f32.mrb[0].mxu0
    %v235 = vpop.f32.mrb[0].mxu0
    %v236 = vadd.f32 %v108, %v235
    %v237 = vpop.f32.mrb[0].mxu0
    %238 = vmatprep.mubr.bf16.mxu0 0
    %239 = vmatmul.mubr.bf16.gmra.mrb[0].mxu0 %v85
    %v240 = vpop.f32.mrb[0].mxu0
    %v241 = vadd.f32 %v108, %v240
    %v242 = vpop.f32.mrb[0].mxu0
    %v243 = vpop.f32.mrb[0].mxu0
    %v244 = vadd.f32 %v108, %v243
    %v245 = vpop.f32.mrb[0].mxu0
    %246 = vmatprep.mubr.bf16.mxu0 0
    %247 = vmatmul.mubr.bf16.gmra.mrb[0].mxu0 %v86
    %v248 = vpop.f32.mrb[0].mxu0
    %v249 = vadd.f32 %v108, %v248
    %v250 = vpop.f32.mrb[0].mxu0
    %v251 = vpop.f32.mrb[0].mxu0
    %v252 = vadd.f32 %v108, %v251
    %v253 = vpop.f32.mrb[0].mxu0
    %254 = vdwg.mxu0
    %v255 = vmax.f32 %v193, 0.0
    %v256 = vmax.f32 %v196, 0.0
    %v257 = vmax.f32 %v201, 0.0
    %v258 = vmax.f32 %v204, 0.0
    %v259 = vmax.f32 %v209, 0.0
    %v260 = vmax.f32 %v212, 0.0
    %v261 = vmax.f32 %v217, 0.0
    %v262 = vmax.f32 %v220, 0.0
    %v263 = vmax.f32 %v225, 0.0
    %v264 = vmax.f32 %v228, 0.0
    %v265 = vmax.f32 %v233, 0.0
    %v266 = vmax.f32 %v236, 0.0
    %v267 = vmax.f32 %v241, 0.0
    %v268 = vmax.f32 %v244, 0.0
    %v269 = vmax.f32 %v249, 0.0
    %v270 = vmax.f32 %v252, 0.0
    %v271 = vpack.c.bf16 %v256, %v255
    %v272 = vpack.c.bf16 %v258, %v257
    %v273 = vpack.c.bf16 %v260, %v259
    %v274 = vpack.c.bf16 %v262, %v261
    %v275 = vpack.c.bf16 %v264, %v263
    %v276 = vpack.c.bf16 %v266, %v265
    %v277 = vpack.c.bf16 %v268, %v267
    %v278 = vpack.c.bf16 %v270, %v269
    %v279 = vld [vmem:[#allocation7] sm:$0xf]
    %v280 = vld [vmem:[#allocation7 + $0x4] sm:$0xf]
    %v281 = vld [vmem:[#allocation7 + $0x8] sm:$0xf]
    %v282 = vld [vmem:[#allocation7 + $0xc] sm:$0xf]
    %v283 = vld [vmem:[#allocation7 + $0x10] sm:$0xf]
    %v284 = vld [vmem:[#allocation7 + $0x14] sm:$0xf]
    %v285 = vld [vmem:[#allocation7 + $0x18] sm:$0xf]
    %v286 = vld [vmem:[#allocation7 + $0x1c] sm:$0xf]
    %v287 = vld [vmem:[#allocation7 + $0x20] sm:$0xf]
    %v288 = vld [vmem:[#allocation7 + $0x24] sm:$0xf]
    %v289 = vld [vmem:[#allocation7 + $0x28] sm:$0xf]
    %v290 = vld [vmem:[#allocation7 + $0x2c] sm:$0xf]
    %v291 = vld [vmem:[#allocation7 + $0x30] sm:$0xf]
    %v292 = vld [vmem:[#allocation7 + $0x34] sm:$0xf]
    %v293 = vld [vmem:[#allocation7 + $0x38] sm:$0xf]
    %v294 = vld [vmem:[#allocation7 + $0x3c] sm:$0xf]
    %v295 = vld [vmem:[%s4] sm:$0x1]
    %v297 = vlaneseq
    %v298 = vshrl.u32 %v297, 7
    %v299 = vsub.s32 0, %v298
    %v300 = vrot.slane %v295, %v299
    %v318 = vunpack.c.l.b16 %v279
    %v319 = vunpack.c.l.b16 %v280
    %v320 = vunpack.c.l.b16 %v281
    %v321 = vunpack.c.l.b16 %v282
    %v322 = vunpack.c.l.b16 %v283
    %v323 = vunpack.c.l.b16 %v284
    %v324 = vunpack.c.l.b16 %v285
    %v325 = vunpack.c.l.b16 %v286
    %v326 = vunpack.c.l.b16 %v287
    %v327 = vunpack.c.l.b16 %v288
    %v328 = vunpack.c.l.b16 %v289
    %v329 = vunpack.c.l.b16 %v290
    %v330 = vunpack.c.l.b16 %v291
    %v331 = vunpack.c.l.b16 %v292
    %v332 = vunpack.c.l.b16 %v293
    %v333 = vunpack.c.l.b16 %v294
    %v334 = vpack.c.b16 %v319, %v318
    %v335 = vpack.c.b16 %v321, %v320
    %v336 = vpack.c.b16 %v323, %v322
    %v337 = vpack.c.b16 %v325, %v324
    %v338 = vpack.c.b16 %v327, %v326
    %v339 = vpack.c.b16 %v329, %v328
    %v340 = vpack.c.b16 %v331, %v330
    %v341 = vpack.c.b16 %v333, %v332
    %350 = vmatprep.subr.bf16.mxu0 0
    %351 = vmatpush1.bf16.msra.mxu0 %v334
    %352 = vmatprep.subr.bf16.mxu0 0
    %353 = vmatpush1.bf16.msra.mxu0 %v335
    %354 = vmatprep.subr.bf16.mxu0 0
    %355 = vmatpush1.bf16.msra.mxu0 %v336
    %356 = vmatprep.subr.bf16.mxu0 0
    %357 = vmatpush1.bf16.msra.mxu0 %v337
    %358 = vmatprep.subr.bf16.mxu0 0
    %359 = vmatpush1.bf16.msra.mxu0 %v338
    %360 = vmatprep.subr.bf16.mxu0 0
    %361 = vmatpush1.bf16.msra.mxu0 %v339
    %362 = vmatprep.subr.bf16.mxu0 0
    %363 = vmatpush1.bf16.msra.mxu0 %v340
    %364 = vmatprep.subr.bf16.mxu0 0
    %365 = vmatpush1.bf16.msra.mxu0 %v341
    %366 = vmatprep.subr.bf16.mxu0 0
    %367 = vmatpush1.bf16.msra.mxu0 0
    %368 = vmatprep.subr.bf16.mxu0 0
    %369 = vmatpush1.bf16.msra.mxu0 0
    %370 = vmatprep.subr.bf16.mxu0 0
    %371 = vmatpush1.bf16.msra.mxu0 0
    %372 = vmatprep.subr.bf16.mxu0 0
    %373 = vmatpush1.bf16.msra.mxu0 0
    %374 = vmatprep.subr.bf16.mxu0 0
    %375 = vmatpush1.bf16.msra.mxu0 0
    %376 = vmatprep.subr.bf16.mxu0 0
    %377 = vmatpush1.bf16.msra.mxu0 0
    %378 = vmatprep.subr.bf16.mxu0 0
    %379 = vmatpush1.bf16.msra.mxu0 0
    %380 = vmatprep.subr.bf16.mxu0 0
    %381 = vmatpush1.bf16.msra.mxu0 0
    %382 = vmatprep.mubr.bf16.mxu0 0
    %383 = vmatmul.mubr.bf16.gmra.mrb[0].mxu0 %v271
    %v384 = vpop.f32.mrb[0].mxu0
    %v385 = vadd.f32 %v300, %v384
    %v386 = vpop.f32.mrb[0].mxu0
    %v387 = vpop.f32.mrb[0].mxu0
    %v388 = vadd.f32 %v300, %v387
    %v389 = vpop.f32.mrb[0].mxu0
    %390 = vmatprep.mubr.bf16.mxu0 0
    %391 = vmatmul.mubr.bf16.gmra.mrb[0].mxu0 %v272
    %v392 = vpop.f32.mrb[0].mxu0
    %v393 = vadd.f32 %v300, %v392
    %v394 = vpop.f32.mrb[0].mxu0
    %v395 = vpop.f32.mrb[0].mxu0
    %v396 = vadd.f32 %v300, %v395
    %v397 = vpop.f32.mrb[0].mxu0
    %398 = vmatprep.mubr.bf16.mxu0 0
    %399 = vmatmul.mubr.bf16.gmra.mrb[0].mxu0 %v273
    %v400 = vpop.f32.mrb[0].mxu0
    %v401 = vadd.f32 %v300, %v400
    %v402 = vpop.f32.mrb[0].mxu0
    %v403 = vpop.f32.mrb[0].mxu0
    %v404 = vadd.f32 %v300, %v403
    %v405 = vpop.f32.mrb[0].mxu0
    %406 = vmatprep.mubr.bf16.mxu0 0
    %407 = vmatmul.mubr.bf16.gmra.mrb[0].mxu0 %v274
    %v408 = vpop.f32.mrb[0].mxu0
    %v409 = vadd.f32 %v300, %v408
    %v410 = vpop.f32.mrb[0].mxu0
    %v411 = vpop.f32.mrb[0].mxu0
    %v412 = vadd.f32 %v300, %v411
    %v413 = vpop.f32.mrb[0].mxu0
    %414 = vmatprep.mubr.bf16.mxu0 0
    %415 = vmatmul.mubr.bf16.gmra.mrb[0].mxu0 %v275
    %v416 = vpop.f32.mrb[0].mxu0
    %v417 = vadd.f32 %v300, %v416
    %v418 = vpop.f32.mrb[0].mxu0
    %v419 = vpop.f32.mrb[0].mxu0
    %v420 = vadd.f32 %v300, %v419
    %v421 = vpop.f32.mrb[0].mxu0
    %422 = vmatprep.mubr.bf16.mxu0 0
    %423 = vmatmul.mubr.bf16.gmra.mrb[0].mxu0 %v276
    %v424 = vpop.f32.mrb[0].mxu0
    %v425 = vadd.f32 %v300, %v424
    %v426 = vpop.f32.mrb[0].mxu0
    %v427 = vpop.f32.mrb[0].mxu0
    %v428 = vadd.f32 %v300, %v427
    %v429 = vpop.f32.mrb[0].mxu0
    %430 = vmatprep.mubr.bf16.mxu0 0
    %431 = vmatmul.mubr.bf16.gmra.mrb[0].mxu0 %v277
    %v432 = vpop.f32.mrb[0].mxu0
    %v433 = vadd.f32 %v300, %v432
    %v434 = vpop.f32.mrb[0].mxu0
    %v435 = vpop.f32.mrb[0].mxu0
    %v436 = vadd.f32 %v300, %v435
    %v437 = vpop.f32.mrb[0].mxu0
    %438 = vmatprep.mubr.bf16.mxu0 0
    %439 = vmatmul.mubr.bf16.gmra.mrb[0].mxu0 %v278
    %v440 = vpop.f32.mrb[0].mxu0
    %v441 = vadd.f32 %v300, %v440
    %v442 = vpop.f32.mrb[0].mxu0
    %v443 = vpop.f32.mrb[0].mxu0
    %v444 = vadd.f32 %v300, %v443
    %v445 = vpop.f32.mrb[0].mxu0
    %446 = vdwg.mxu0
    %447 = vst [vmem:[#allocation8] sm:$0xff] %v385
    %448 = vst [vmem:[#allocation8 + $0x8] sm:$0xff] %v388
    %449 = vst [vmem:[#allocation8 + $0x10] sm:$0xff] %v393
    %450 = vst [vmem:[#allocation8 + $0x18] sm:$0xff] %v396
    %451 = vst [vmem:[#allocation8 + $0x20] sm:$0xff] %v401
    %452 = vst [vmem:[#allocation8 + $0x28] sm:$0xff] %v404
    %453 = vst [vmem:[#allocation8 + $0x30] sm:$0xff] %v409
    %454 = vst [vmem:[#allocation8 + $0x38] sm:$0xff] %v412
    %455 = vst [vmem:[#allocation8 + $0x40] sm:$0xff] %v417
    %456 = vst [vmem:[#allocation8 + $0x48] sm:$0xff] %v420
    %457 = vst [vmem:[#allocation8 + $0x50] sm:$0xff] %v425
    %458 = vst [vmem:[#allocation8 + $0x58] sm:$0xff] %v428
    %459 = vst [vmem:[#allocation8 + $0x60] sm:$0xff] %v433
    %460 = vst [vmem:[#allocation8 + $0x68] sm:$0xff] %v436
    %461 = vst [vmem:[#allocation8 + $0x70] sm:$0xff] %v441
    %462 = vst [vmem:[#allocation8 + $0x78] sm:$0xff] %v444
    // Predicated region
    $region34: #{tpu_custom_call.1} parent=1 // pred_check
      _
    $region35: #{tpu_custom_call.1} parent=1 // pred_check_branch
      %464 = sbr.rel (0) target = $region37
    $region36: #{tpu_custom_call.1} parent=1 // pred_region
      %s466 = ssub.s32 2048, 2048
      %467 = vsyncadd [#allocation4], %s466
      %s468 = sshll.u32 [#allocation8], 4
      %s469 = int_to_ptr.vmem [resolvable:$true] %s468
      %474 = dma.vmem_to_hbm [thread:$0]  %s469, 2048, %s5, [#allocation4], 128, 128, 8
    $region37: #{tpu_custom_call.1} parent=1 // pred_fallthru
      _
    // Predicated region
    $region38: #{tpu_custom_call.1} parent=1 // pred_check
      _
    $region39: #{tpu_custom_call.1} parent=1 // pred_check_branch
      %476 = sbr.rel (0) target = $region41
    $region40: #{tpu_custom_call.1} parent=1 // pred_region
      %477 = dma.done [#allocation4], 2048
    $region41: #{tpu_custom_call.1} parent=1 // pred_fallthru
      _
    %478 = vsyncpa [#allocation3], 1
    %479 = vsyncpa [#allocation6], 1
    %480 = vsyncpa [#allocation4], 1

</llo_original>
